<compile_context>
chip_gen: v7x
topology: tpu7x:2x2x1
jax: 0.10.0
libtpu: 0.0.40
codegen_flags: <defaults>
</compile_context>

<pallas_src>
import functools

import jax
import jax.numpy as jnp
from jax import lax
from jax.experimental import pallas as pl
from jax.experimental.pallas import tpu as pltpu


def _round_up(n, m):
    return ((n + m - 1) // m) * m


def policy_net_kernel(x_ref, w1_ref, b1_ref, w2_ref, b2_ref, out_ref, *, action_num):
    # fc1 on the MXU: bf16 operands, f32 accumulation.
    h = jnp.dot(x_ref[...], w1_ref[...], preferred_element_type=jnp.float32)
    h = jnp.maximum(h + b1_ref[...], 0.0)                       # bias + ReLU in f32 (VPU)

    # fc2 on the MXU: cast hidden back to bf16 (native MXU format), accumulate in f32.
    logits = jnp.dot(h.astype(jnp.bfloat16), w2_ref[...],
                     preferred_element_type=jnp.float32) + b2_ref[...]

    # Mask the padded action lanes so they don't contribute to the softmax.
    lane = lax.broadcasted_iota(jnp.int32, logits.shape, dimension=1)
    logits = jnp.where(lane < action_num, logits, jnp.float32(-1e30))

    # Numerically stable softmax over actions (axis=1), f32 throughout.
    m = jnp.max(logits, axis=1, keepdims=True)
    e = jnp.exp(logits - m)
    denom = jnp.sum(e, axis=1, keepdims=True)
    out_ref[...] = (e * pl.reciprocal(denom, approx=True)).astype(out_ref.dtype)


def policy_net_forward(x, w1, b1, w2, b2, *, block_rows=256):
    """x: (B, S) f32; w1: (S, H); b1: (1, H); w2: (H, A); b2: (1, A). Returns (B, A) probs."""
    B, S = x.shape
    H = w1.shape[1]
    A = w2.shape[1]

    # Lane-dense output: pad the action axis to a full 128-lane vreg.
    A_pad = _round_up(max(A, 1), 128)

    # Batch tile: big (block_rows) at scale, but never larger than the padded batch.
    B8 = _round_up(B, 8)
    TB = min(block_rows, B8)
    B_pad = _round_up(B, TB)

    # Stream x as bf16 (halves streamed bytes); weights as bf16; biases stay f32.
    x_p = jnp.zeros((B_pad, S), jnp.bfloat16).at[:B, :].set(x.astype(jnp.bfloat16))
    w1_b = w1.astype(jnp.bfloat16)
    w2_p = jnp.zeros((H, A_pad), jnp.bfloat16).at[:, :A].set(w2.astype(jnp.bfloat16))
    b1_f = b1.astype(jnp.float32).reshape(1, H)
    b2_p = jnp.zeros((1, A_pad), jnp.float32).at[:, :A].set(
        b2.astype(jnp.float32).reshape(1, A))

    grid = (B_pad // TB,)
    kernel = functools.partial(policy_net_kernel, action_num=A)

    out = pl.pallas_call(
        kernel,
        out_shape=jax.ShapeDtypeStruct((B_pad, A_pad), jnp.float32),
        grid_spec=pltpu.PrefetchScalarGridSpec(
            num_scalar_prefetch=0,
            grid=grid,
            in_specs=[
                # Activations stream per batch tile.
                pl.BlockSpec((TB, S), lambda i: (i, 0)),
                # Weights/biases: constant index_maps -> VMEM-resident across all tiles.
                pl.BlockSpec((S, H), lambda i: (0, 0)),
                pl.BlockSpec((1, H), lambda i: (0, 0)),
                pl.BlockSpec((H, A_pad), lambda i: (0, 0)),
                pl.BlockSpec((1, A_pad), lambda i: (0, 0)),
            ],
            out_specs=pl.BlockSpec((TB, A_pad), lambda i: (i, 0)),
        ),
        compiler_params=pltpu.CompilerParams(
            dimension_semantics=("parallel",),
        ),
    )(x_p, w1_b, b1_f, w2_p, b2_p)

    return out[:B, :A]


def init_params(key, state_dim, action_num, hidden_dim):
    # Deterministic init mimicking nn.Linear default: U(-1/sqrt(fan_in), +1/sqrt(fan_in)).
    k1, k2, k3, k4 = jax.random.split(key, 4)
    bound1 = 1.0 / jnp.sqrt(state_dim)
    bound2 = 1.0 / jnp.sqrt(hidden_dim)
    w1 = jax.random.uniform(k1, (state_dim, hidden_dim), jnp.float32, -bound1, bound1)
    b1 = jax.random.uniform(k2, (1, hidden_dim), jnp.float32, -bound1, bound1)
    w2 = jax.random.uniform(k3, (hidden_dim, action_num), jnp.float32, -bound2, bound2)
    b2 = jax.random.uniform(k4, (1, action_num), jnp.float32, -bound2, bound2)
    return w1, b1, w2, b2


if __name__ == "__main__":
    key = jax.random.PRNGKey(0)
    batch, state_dim, action_num, hidden_dim = 8, 16, 6, 32

    kx, kp = jax.random.split(key)
    x = jax.random.normal(kx, (batch, state_dim), jnp.float32)
    w1, b1, w2, b2 = init_params(kp, state_dim, action_num, hidden_dim)

    probs = policy_net_forward(x, w1, b1, w2, b2)
    probs = jax.block_until_ready(probs)

    # Reference check in plain JAX (same math as the PyTorch forward), f32.
    # Tolerances loosened to account for bf16 MXU operands + approx reciprocal.
    h_ref = jnp.maximum(x @ w1 + b1, 0.0)
    logits_ref = h_ref @ w2 + b2
    probs_ref = jax.nn.softmax(logits_ref, axis=1)
    assert probs.shape == (batch, action_num)
    assert jnp.allclose(probs, probs_ref, atol=2e-2, rtol=2e-2), (
        jnp.max(jnp.abs(probs - probs_ref)))
    assert jnp.allclose(jnp.sum(probs, axis=1), 1.0, atol=1e-2)

    print("KERNEL_OK")
</pallas_src>

<mosaic_0001>
module attributes {stable_mosaic.version = 11 : i64} {
  func.func @policy_net_kernel(%arg0: i32, %arg1: memref<8x16xbf16, #tpu.memory_space<vmem>>, %arg2: memref<16x32xbf16, #tpu.memory_space<vmem>>, %arg3: memref<1x32xf32, #tpu.memory_space<vmem>>, %arg4: memref<32x128xbf16, #tpu.memory_space<vmem>>, %arg5: memref<1x128xf32, #tpu.memory_space<vmem>>, %arg6: memref<8x128xf32, #tpu.memory_space<vmem>>) attributes {dimension_semantics = [#tpu.dimension_semantics<parallel>], iteration_bounds = array<i64: 1>, scalar_prefetch = 0 : i64, scratch_operands = 0 : i64, tpu.core_type = #tpu.core_type<tc>, window_params = [{transform_indices = @transform_0, window_bounds = array<i64: 8, 16>}, {pipeline_mode = #tpu.pipeline_mode<synchronous>, transform_indices = @transform_1, window_bounds = array<i64: 16, 32>}, {pipeline_mode = #tpu.pipeline_mode<synchronous>, transform_indices = @transform_2, window_bounds = array<i64: 1, 32>}, {pipeline_mode = #tpu.pipeline_mode<synchronous>, transform_indices = @transform_3, window_bounds = array<i64: 32, 128>}, {pipeline_mode = #tpu.pipeline_mode<synchronous>, transform_indices = @transform_4, window_bounds = array<i64: 1, 128>}, {transform_indices = @transform_5, window_bounds = array<i64: 8, 128>}]} {
    %c0 = arith.constant 0 : index
    %c0_0 = arith.constant 0 : index
    %0 = vector.load %arg1[%c0, %c0_0] : memref<8x16xbf16, #tpu.memory_space<vmem>>, vector<8x16xbf16>
    %c0_1 = arith.constant 0 : index
    %c0_2 = arith.constant 0 : index
    %1 = vector.load %arg2[%c0_1, %c0_2] : memref<16x32xbf16, #tpu.memory_space<vmem>>, vector<16x32xbf16>
    %cst = arith.constant dense<0.000000e+00> : vector<8x32xf32>
    %2 = tpu.matmul %0, %1, %cst {dimension_numbers = #tpu.dot_dimension_numbers<[1], [0], [0], [1], [0, 0, 1, 1], [], []>} : vector<8x16xbf16>, vector<16x32xbf16>, vector<8x32xf32> -> vector<8x32xf32>
    %c0_3 = arith.constant 0 : index
    %c0_4 = arith.constant 0 : index
    %3 = vector.load %arg3[%c0_3, %c0_4] : memref<1x32xf32, #tpu.memory_space<vmem>>, vector<1x32xf32>
    %4 = vector.broadcast %3 : vector<1x32xf32> to vector<8x32xf32>
    %5 = arith.addf %2, %4 : vector<8x32xf32>
    %cst_5 = arith.constant 0.000000e+00 : f32
    %6 = vector.broadcast %cst_5 : f32 to vector<8x32xf32>
    %7 = arith.maximumf %5, %6 : vector<8x32xf32>
    %8 = arith.truncf %7 : vector<8x32xf32> to vector<8x32xbf16>
    %c0_6 = arith.constant 0 : index
    %c0_7 = arith.constant 0 : index
    %9 = vector.load %arg4[%c0_6, %c0_7] : memref<32x128xbf16, #tpu.memory_space<vmem>>, vector<32x128xbf16>
    %cst_8 = arith.constant dense<0.000000e+00> : vector<8x128xf32>
    %10 = tpu.matmul %8, %9, %cst_8 {dimension_numbers = #tpu.dot_dimension_numbers<[1], [0], [0], [1], [0, 0, 1, 1], [], []>} : vector<8x32xbf16>, vector<32x128xbf16>, vector<8x128xf32> -> vector<8x128xf32>
    %c0_9 = arith.constant 0 : index
    %c0_10 = arith.constant 0 : index
    %11 = vector.load %arg5[%c0_9, %c0_10] : memref<1x128xf32, #tpu.memory_space<vmem>>, vector<1x128xf32>
    %12 = vector.broadcast %11 : vector<1x128xf32> to vector<8x128xf32>
    %13 = arith.addf %10, %12 : vector<8x128xf32>
    %14 = tpu.iota {dimensions = array<i32: 1>} : vector<8x128xi32>
    %c6_i32 = arith.constant 6 : i32
    %15 = vector.broadcast %c6_i32 : i32 to vector<8x128xi32>
    %16 = arith.cmpi slt, %14, %15 : vector<8x128xi32>
    %cst_11 = arith.constant -1.000000e+30 : f32
    %17 = vector.broadcast %cst_11 : f32 to vector<8x128xf32>
    %18 = arith.select %16, %13, %17 : vector<8x128xi1>, vector<8x128xf32>
    %cst_12 = arith.constant dense<0xFF800000> : vector<8xf32>
    %19 = vector.multi_reduction <maximumf>, %18, %cst_12 [1] : vector<8x128xf32> to vector<8xf32>
    %20 = vector.shape_cast %19 : vector<8xf32> to vector<8x1xf32>
    %21 = vector.broadcast %20 : vector<8x1xf32> to vector<8x128xf32>
    %22 = arith.subf %18, %21 : vector<8x128xf32>
    %23 = math.exp %22 : vector<8x128xf32>
    %cst_13 = arith.constant dense<0.000000e+00> : vector<8xf32>
    %24 = vector.multi_reduction <add>, %23, %cst_13 [1] : vector<8x128xf32> to vector<8xf32>
    %25 = vector.shape_cast %24 : vector<8xf32> to vector<8x1xf32>
    %26 = tpu.reciprocal %25 {approx = true} : vector<8x1xf32> -> vector<8x1xf32>
    %27 = vector.broadcast %26 : vector<8x1xf32> to vector<8x128xf32>
    %28 = arith.mulf %23, %27 : vector<8x128xf32>
    %c0_14 = arith.constant 0 : index
    %c0_15 = arith.constant 0 : index
    %29 = vector.load %arg6[%c0_14, %c0_15] : memref<8x128xf32, #tpu.memory_space<vmem>>, vector<8x128xf32>
    tpu.vector_store %arg6[%c0_14, %c0_15], %28 {strides = array<i32>} : memref<8x128xf32, #tpu.memory_space<vmem>>, vector<8x128xf32>,
    return
  }
  func.func @transform_0(%arg0: i32) -> (i32, i32) {
    %c0_i32 = arith.constant 0 : i32
    %c0_i32_0 = arith.constant 0 : i32
    return %arg0, %c0_i32 : i32, i32
  }
  func.func @transform_1(%arg0: i32) -> (i32, i32) {
    %c0_i32 = arith.constant 0 : i32
    %c0_i32_0 = arith.constant 0 : i32
    %c0_i32_1 = arith.constant 0 : i32
    return %c0_i32, %c0_i32_0 : i32, i32
  }
  func.func @transform_2(%arg0: i32) -> (i32, i32) {
    %c0_i32 = arith.constant 0 : i32
    %c0_i32_0 = arith.constant 0 : i32
    %c0_i32_1 = arith.constant 0 : i32
    return %c0_i32, %c0_i32_0 : i32, i32
  }
  func.func @transform_3(%arg0: i32) -> (i32, i32) {
    %c0_i32 = arith.constant 0 : i32
    %c0_i32_0 = arith.constant 0 : i32
    %c0_i32_1 = arith.constant 0 : i32
    return %c0_i32, %c0_i32_0 : i32, i32
  }
  func.func @transform_4(%arg0: i32) -> (i32, i32) {
    %c0_i32 = arith.constant 0 : i32
    %c0_i32_0 = arith.constant 0 : i32
    %c0_i32_1 = arith.constant 0 : i32
    return %c0_i32, %c0_i32_0 : i32, i32
  }
  func.func @transform_5(%arg0: i32) -> (i32, i32) {
    %c0_i32 = arith.constant 0 : i32
    %c0_i32_0 = arith.constant 0 : i32
    return %arg0, %c0_i32 : i32, i32
  }
}

</mosaic_0001>

<llo_original>
// kernel: tpu_custom_call.1
$region0: #{tpu_custom_call.1}
  #allocation0 [shape = 'u32[]', space=smem, size = 0x4, offset = 0x4, fixed_abs, tag = 'smem constant byte address 0x4 - core index']
  #allocation1 [shape = 'u32[144,128]{1,0:T(1,128)}', space=vmem, size = 0x12000, scoped, tag = 'internal scratch']
  %s0 = inlined_call_operand.hbm [shape: bf16[8,16], index: 0, kind: input, shape index: {}]
  %s1 = inlined_call_operand.hbm [shape: bf16[16,32], index: 1, kind: input, shape index: {}]
  %s2 = inlined_call_operand.vmem [shape: f32[1,32], index: 2, kind: input, shape index: {}]
  %s3 = inlined_call_operand.hbm [shape: bf16[32,128], index: 3, kind: input, shape index: {}]
  %s4 = inlined_call_operand.vmem [shape: f32[1,128], index: 4, kind: input, shape index: {}]
  %s5 = inlined_call_operand.hbm [shape: f32[8,128], index: 5, kind: output, shape index: {}]
  %s6 = sld [smem:[#allocation0]]
  $region42: #{tpu_custom_call.1} parent=0
    _
  %s8 = ssub.s32 1, %s6
  %s9 = scalar_select 0, %s8, %s6
  $region1: #{tpu_custom_call.1} parent=0
    #allocation2 [shape = 'u8[2048]{0}', space=vmem, size = 0x800, scoped, tag = 'input window, operand 0, single buffered']
    #allocation3 [shape = 's32[1]{0}', space=sflag, size = 0x4, scoped, tag = 'scoped memory for tpu_custom_call.1']
    #allocation4 [shape = 's32[1]{0}', space=sflag, size = 0x4, scoped, tag = 'scoped memory for tpu_custom_call.1']
    #allocation5 [shape = 'u8[4096]{0}', space=vmem, size = 0x1000, scoped, tag = 'input window, operand 1, single buffered']
    #allocation6 [shape = 's32[1]{0}', space=sflag, size = 0x4, scoped, tag = 'scoped memory for tpu_custom_call.1']
    #allocation7 [shape = 'u8[8192]{0}', space=vmem, size = 0x2000, scoped, tag = 'input window, operand 3, single buffered']
    #allocation8 [shape = 'u8[4096]{0}', space=vmem, size = 0x1000, scoped, tag = 'output window, operand 0, single buffered']
    %10 = vsyncpa [#allocation3], 0
    %11 = vsyncpa [#allocation6], 0
    %12 = vsyncpa [#allocation4], 0
    // Predicated region
    $region2: #{tpu_custom_call.1} parent=1 // pred_check
      _
    $region3: #{tpu_custom_call.1} parent=1 // pred_check_branch
      %14 = sbr.rel (0) target = $region5
    $region4: #{tpu_custom_call.1} parent=1 // pred_region
      %s16 = ssub.s32 64, 64
      %17 = vsyncadd [#allocation3], %s16
      %s19 = sshll.u32 [#allocation2], 4
      %s20 = int_to_ptr.vmem [resolvable:$true] %s19
      %22 = dma.hbm_to_vmem [thread:$0]  %s0, 64, %s20, [#allocation3]
    $region5: #{tpu_custom_call.1} parent=1 // pred_fallthru
      _
    // Predicated region
    $region6: #{tpu_custom_call.1} parent=1 // pred_check
      _
    $region7: #{tpu_custom_call.1} parent=1 // pred_check_branch
      %24 = sbr.rel (0) target = $region9
    $region8: #{tpu_custom_call.1} parent=1 // pred_region
      %s26 = ssub.s32 128, 128
      %27 = vsyncadd [#allocation6], %s26
      %s28 = sshll.u32 [#allocation5], 4
      %s29 = int_to_ptr.vmem [resolvable:$true] %s28
      %34 = dma.hbm_to_vmem [thread:$0]  %s1, 128, %s29, [#allocation6], 64, 64, 4
    $region9: #{tpu_custom_call.1} parent=1 // pred_fallthru
      _
    // Predicated region
    $region10: #{tpu_custom_call.1} parent=1 // pred_check
      _
    $region11: #{tpu_custom_call.1} parent=1 // pred_check_branch
      %36 = sbr.rel (0) target = $region13
    $region12: #{tpu_custom_call.1} parent=1 // pred_region
      _
    $region13: #{tpu_custom_call.1} parent=1 // pred_fallthru
      _
    // Predicated region
    $region14: #{tpu_custom_call.1} parent=1 // pred_check
      _
    $region15: #{tpu_custom_call.1} parent=1 // pred_check_branch
      %38 = sbr.rel (0) target = $region17
    $region16: #{tpu_custom_call.1} parent=1 // pred_region
      %s40 = ssub.s32 256, 256
      %41 = vsyncadd [#allocation6], %s40
      %s42 = sshll.u32 [#allocation7], 4
      %s43 = int_to_ptr.vmem [resolvable:$true] %s42
      %48 = dma.hbm_to_vmem [thread:$0]  %s3, 256, %s43, [#allocation6], 64, 64, 4
    $region17: #{tpu_custom_call.1} parent=1 // pred_fallthru
      _
    // Predicated region
    $region18: #{tpu_custom_call.1} parent=1 // pred_check
      _
    $region19: #{tpu_custom_call.1} parent=1 // pred_check_branch
      %50 = sbr.rel (0) target = $region21
    $region20: #{tpu_custom_call.1} parent=1 // pred_region
      _
    $region21: #{tpu_custom_call.1} parent=1 // pred_fallthru
      _
    // Predicated region
    $region22: #{tpu_custom_call.1} parent=1 // pred_check
      _
    $region23: #{tpu_custom_call.1} parent=1 // pred_check_branch
      %52 = sbr.rel (0) target = $region25
    $region24: #{tpu_custom_call.1} parent=1 // pred_region
      %53 = dma.done [#allocation3], 64
    $region25: #{tpu_custom_call.1} parent=1 // pred_fallthru
      _
    // Predicated region
    $region26: #{tpu_custom_call.1} parent=1 // pred_check
      _
    $region27: #{tpu_custom_call.1} parent=1 // pred_check_branch
      %55 = sbr.rel (0) target = $region29
    $region28: #{tpu_custom_call.1} parent=1 // pred_region
      %56 = dma.done [#allocation6], 128
    $region29: #{tpu_custom_call.1} parent=1 // pred_fallthru
      _
    // Predicated region
    $region30: #{tpu_custom_call.1} parent=1 // pred_check
      _
    $region31: #{tpu_custom_call.1} parent=1 // pred_check_branch
      %58 = sbr.rel (0) target = $region33
    $region32: #{tpu_custom_call.1} parent=1 // pred_region
      %59 = dma.done [#allocation6], 256
    $region33: #{tpu_custom_call.1} parent=1 // pred_fallthru
      _
    %v61 = vld [vmem:[#allocation2] sm:$0xf]
    %v62 = vld [vmem:[#allocation5] sm:$0xf]
    %v63 = vld [vmem:[#allocation5 + $0x4] sm:$0xf]
    %v64 = vld [vmem:[%s2] sm:$0x1]
    %v66 = vlaneseq
    %v67 = vshrl.u32 %v66, 7
    %v68 = vsub.s32 0, %v67
    %v69 = vrot.slane %v64, %v68
    %v73 = vunpack.c.l.b16 %v62
    %v74 = vunpack.c.l.b16 %v63
    %v75 = vpack.c.b16 %v74, %v73
    %vm77 = vcmask 130048
    %v79 = vsel %vm77, %v61, 0
    %81 = vmatprep.subr.bf16.mxu0 0
    %82 = vmatpush1.bf16.msra.mxu0 %v75
    %83 = vmatprep.subr.bf16.mxu0 0
    %84 = vmatpush1.bf16.msra.mxu0 0
    %85 = vmatprep.subr.bf16.mxu0 0
    %86 = vmatpush1.bf16.msra.mxu0 0
    %87 = vmatprep.subr.bf16.mxu0 0
    %88 = vmatpush1.bf16.msra.mxu0 0
    %89 = vmatprep.subr.bf16.mxu0 0
    %90 = vmatpush1.bf16.msra.mxu0 0
    %91 = vmatprep.subr.bf16.mxu0 0
    %92 = vmatpush1.bf16.msra.mxu0 0
    %93 = vmatprep.subr.bf16.mxu0 0
    %94 = vmatpush1.bf16.msra.mxu0 0
    %95 = vmatprep.subr.bf16.mxu0 0
    %96 = vmatpush1.bf16.msra.mxu0 0
    %97 = vmatprep.subr.bf16.mxu0 0
    %98 = vmatpush1.bf16.msra.mxu0 0
    %99 = vmatprep.subr.bf16.mxu0 0
    %100 = vmatpush1.bf16.msra.mxu0 0
    %101 = vmatprep.subr.bf16.mxu0 0
    %102 = vmatpush1.bf16.msra.mxu0 0
    %103 = vmatprep.subr.bf16.mxu0 0
    %104 = vmatpush1.bf16.msra.mxu0 0
    %105 = vmatprep.subr.bf16.mxu0 0
    %106 = vmatpush1.bf16.msra.mxu0 0
    %107 = vmatprep.subr.bf16.mxu0 0
    %108 = vmatpush1.bf16.msra.mxu0 0
    %109 = vmatprep.subr.bf16.mxu0 0
    %110 = vmatpush1.bf16.msra.mxu0 0
    %111 = vmatprep.subr.bf16.mxu0 0
    %112 = vmatpush1.bf16.msra.mxu0 0
    %113 = vmatprep.mubr.bf16.mxu0 0
    %114 = vmatmul.mubr.bf16.gmra.mrb[0].mxu0 %v79
    %v115 = vpop.f32.mrb[0].mxu0
    %v116 = vadd.f32 %v69, %v115
    %v117 = vpop.f32.mrb[0].mxu0
    %v118 = vpop.f32.mrb[0].mxu0
    %v119 = vpop.f32.mrb[0].mxu0
    %120 = vdwg.mxu0
    %v121 = vmax.f32 %v116, 0.0
    %v122 = vpack.c.bf16 %v121, %v121
    %v123 = vld [vmem:[#allocation7] sm:$0xf]
    %v124 = vld [vmem:[#allocation7 + $0x4] sm:$0xf]
    %v125 = vld [vmem:[#allocation7 + $0x8] sm:$0xf]
    %v126 = vld [vmem:[#allocation7 + $0xc] sm:$0xf]
    %v127 = vld [vmem:[%s4] sm:$0x1]
    %v129 = vlaneseq
    %v130 = vshrl.u32 %v129, 7
    %v131 = vsub.s32 0, %v130
    %v132 = vrot.slane %v127, %v131
    %v138 = vunpack.c.l.b16 %v123
    %v139 = vunpack.c.l.b16 %v124
    %v140 = vunpack.c.l.b16 %v125
    %v141 = vunpack.c.l.b16 %v126
    %v142 = vpack.c.b16 %v139, %v138
    %v143 = vpack.c.b16 %v141, %v140
    %vm146 = vcmask 261120
    %v148 = vsel %vm146, %v122, 0
    %150 = vmatprep.subr.bf16.mxu0 0
    %151 = vmatpush1.bf16.msra.mxu0 %v142
    %152 = vmatprep.subr.bf16.mxu0 0
    %153 = vmatpush1.bf16.msra.mxu0 %v143
    %154 = vmatprep.subr.bf16.mxu0 0
    %155 = vmatpush1.bf16.msra.mxu0 0
    %156 = vmatprep.subr.bf16.mxu0 0
    %157 = vmatpush1.bf16.msra.mxu0 0
    %158 = vmatprep.subr.bf16.mxu0 0
    %159 = vmatpush1.bf16.msra.mxu0 0
    %160 = vmatprep.subr.bf16.mxu0 0
    %161 = vmatpush1.bf16.msra.mxu0 0
    %162 = vmatprep.subr.bf16.mxu0 0
    %163 = vmatpush1.bf16.msra.mxu0 0
    %164 = vmatprep.subr.bf16.mxu0 0
    %165 = vmatpush1.bf16.msra.mxu0 0
    %166 = vmatprep.subr.bf16.mxu0 0
    %167 = vmatpush1.bf16.msra.mxu0 0
    %168 = vmatprep.subr.bf16.mxu0 0
    %169 = vmatpush1.bf16.msra.mxu0 0
    %170 = vmatprep.subr.bf16.mxu0 0
    %171 = vmatpush1.bf16.msra.mxu0 0
    %172 = vmatprep.subr.bf16.mxu0 0
    %173 = vmatpush1.bf16.msra.mxu0 0
    %174 = vmatprep.subr.bf16.mxu0 0
    %175 = vmatpush1.bf16.msra.mxu0 0
    %176 = vmatprep.subr.bf16.mxu0 0
    %177 = vmatpush1.bf16.msra.mxu0 0
    %178 = vmatprep.subr.bf16.mxu0 0
    %179 = vmatpush1.bf16.msra.mxu0 0
    %180 = vmatprep.subr.bf16.mxu0 0
    %181 = vmatpush1.bf16.msra.mxu0 0
    %182 = vmatprep.mubr.bf16.mxu0 0
    %183 = vmatmul.mubr.bf16.gmra.mrb[0].mxu0 %v148
    %v184 = vpop.f32.mrb[0].mxu0
    %v185 = vadd.f32 %v132, %v184
    %v186 = vpop.f32.mrb[0].mxu0
    %v187 = vpop.f32.mrb[0].mxu0
    %v188 = vpop.f32.mrb[0].mxu0
    %189 = vdwg.mxu0
    %v190 = vlaneseq
    %v191 = vand.u32 %v190, 127
    %vm192 = vcmp.lt.s32.totalorder %v191, 6
    %v193 = vsel %vm192, %v185, -1e+30
    %194 = vmax.xlane.f32.xlu0 %v193
    %v195 = vpop.xlane.xlu0 %194
    %v196 = vsub.f32 %v193, %v195
    %v197 = vmul.f32 %v196, 1.442695
    %v198 = vpow.pop %v197
    %199 = vadd.xlane.f32.xlu0 %v198
    %v200 = vpop.xlane.xlu0 %199
    %v201 = vrcp.pop %v200
    %v202 = vmul.f32 %v198, %v201
    %203 = vst [vmem:[#allocation8] sm:$0xff] %v202
    // Predicated region
    $region34: #{tpu_custom_call.1} parent=1 // pred_check
      _
    $region35: #{tpu_custom_call.1} parent=1 // pred_check_branch
      %205 = sbr.rel (0) target = $region37
    $region36: #{tpu_custom_call.1} parent=1 // pred_region
      %s207 = ssub.s32 128, 128
      %208 = vsyncadd [#allocation4], %s207
      %s210 = sshll.u32 [#allocation8], 4
      %s211 = int_to_ptr.vmem [resolvable:$true] %s210
      %213 = dma.vmem_to_hbm [thread:$0]  %s211, 128, %s5, [#allocation4]
    $region37: #{tpu_custom_call.1} parent=1 // pred_fallthru
      _
    // Predicated region
    $region38: #{tpu_custom_call.1} parent=1 // pred_check
      _
    $region39: #{tpu_custom_call.1} parent=1 // pred_check_branch
      %215 = sbr.rel (0) target = $region41
    $region40: #{tpu_custom_call.1} parent=1 // pred_region
      %216 = dma.done [#allocation4], 128
    $region41: #{tpu_custom_call.1} parent=1 // pred_fallthru
      _
    %217 = vsyncpa [#allocation3], 1
    %218 = vsyncpa [#allocation6], 1
    %219 = vsyncpa [#allocation4], 1

</llo_original>
